<compile_context>
chip_gen: v7x
topology: tpu7x:2x2x1
jax: 0.10.0
libtpu: 0.0.40
codegen_flags: <defaults>
</compile_context>

<pallas_src>
import functools

import jax
import jax.numpy as jnp
from jax.experimental import pallas as pl
from jax.experimental.pallas import tpu as pltpu


def _round_up(x, m):
    return ((x + m - 1) // m) * m


def _supports_bf16_epilogue():
    """bf16 VPU arithmetic is native on v6e / v7x; keep f32 elementwise on v5e."""
    try:
        kind = jax.devices()[0].device_kind.lower()
    except Exception:
        return False
    return ("v6" in kind) or ("v7" in kind) or ("7x" in kind)


def _choose_tb(B, tb):
    """Batch-tile selection.

    - Large B (> tb): use the requested tile (keep tb a multiple of 128).
    - Medium B: split into >=2 tiles (multiples of 128) so both TensorCores are
      used on v7x under dimension_semantics=("parallel",).
    - Tiny B: round up to the 8-sublane minimum.
    """
    if B > tb:
        return tb
    if B >= 256:
        return _round_up((B + 1) // 2, 128)
    return max(8, _round_up(B, 8))


def ddpg_critic_kernel(state_ref, action_ref, w1_ref, w2_ref, p1_ref, p2_ref,
                       out_ref, *, n1, n2, n_actions, bf16_epilogue):
    eps = jnp.float32(1e-5)
    inv_n1 = jnp.float32(1.0 / n1)   # true (unpadded) feature counts for LN stats
    inv_n2 = jnp.float32(1.0 / n2)
    edt = jnp.bfloat16 if bf16_epilogue else jnp.float32

    # Packed per-feature parameter rows (padded lanes are exactly zero).
    b1 = p1_ref[0:1, :]                                   # f32, added to f32 MXU out
    g1 = p1_ref[1:2, :].astype(edt)
    beta1 = p1_ref[2:3, :].astype(edt)
    b2 = p2_ref[0:1, :]
    g2 = p2_ref[1:2, :].astype(edt)
    beta2 = p2_ref[2:3, :].astype(edt)
    ba = p2_ref[3:4, :].astype(edt)
    wq = p2_ref[4:5, :]                                   # f32: final Q reduce stays f32
    wa = p2_ref[5:5 + n_actions, :].astype(edt)

    # ---- fc1 on the MXU: bf16 x bf16 -> f32 accumulate ----
    x = state_ref[...].astype(jnp.bfloat16)
    h1 = jnp.dot(x, w1_ref[...], preferred_element_type=jnp.float32) + b1

    # ---- bn1 (LayerNorm): one-pass stats in f32, apply/ReLU in epilogue dtype ----
    s1 = jnp.sum(h1, axis=-1, keepdims=True)
    sq1 = jnp.sum(h1 * h1, axis=-1, keepdims=True)
    mu1 = s1 * inv_n1
    var1 = sq1 * inv_n1 - mu1 * mu1
    inv1 = jax.lax.rsqrt(var1 + eps)
    h1n = (h1.astype(edt) - mu1.astype(edt)) * inv1.astype(edt) * g1 + beta1
    h1n = jnp.maximum(h1n, 0).astype(jnp.bfloat16)        # ReLU + MXU input dtype

    # ---- fc2 on the MXU ----
    h2 = jnp.dot(h1n, w2_ref[...], preferred_element_type=jnp.float32) + b2

    # ---- bn2 (LayerNorm) ----
    s2 = jnp.sum(h2, axis=-1, keepdims=True)
    sq2 = jnp.sum(h2 * h2, axis=-1, keepdims=True)
    mu2 = s2 * inv_n2
    var2 = sq2 * inv_n2 - mu2 * mu2
    inv2 = jax.lax.rsqrt(var2 + eps)
    h2n = (h2.astype(edt) - mu2.astype(edt)) * inv2.astype(edt) * g2 + beta2

    # ---- action branch on the VPU (n_actions is tiny; keep it off the MXU) ----
    a = action_ref[...]                                   # [TB, n_actions] f32
    av = ba + a[:, 0:1].astype(edt) * wa[0:1, :]
    for k in range(1, n_actions):                         # static unroll
        av = av + a[:, k:k + 1].astype(edt) * wa[k:k + 1, :]
    av = jnp.maximum(av, 0)

    # ---- combine + N=1 Q head: multiply + f32 lane reduce; lane-dense output ----
    sav = jnp.maximum(h2n + av, 0)
    q = jnp.sum(sav.astype(jnp.float32) * wq, axis=-1)    # [TB]
    out_ref[...] = q.reshape(out_ref.shape)               # dense [1, 1, TB] row


def init_params(key, input_dims=8, fc1_dims=400, fc2_dims=300, n_actions=2):
    """Deterministic init matching DDPGCritic.__init__ semantics (shapes + bounds)."""
    ks = jax.random.split(key, 8)
    f1 = 1.0 / jnp.sqrt(jnp.float32(fc1_dims))   # fc1.weight.size()[0] == out_features
    f2 = 1.0 / jnp.sqrt(jnp.float32(fc2_dims))
    f3 = jnp.float32(0.0003)
    fa = 1.0 / jnp.sqrt(jnp.float32(n_actions))  # default nn.Linear init bound

    def u(k, shape, bound):
        return jax.random.uniform(k, shape, jnp.float32, -bound, bound)

    return {
        # stored [in, out] (transposed relative to torch's [out, in])
        "w1": u(ks[0], (input_dims, fc1_dims), f1),
        "b1": u(ks[1], (1, fc1_dims), f1),
        "g1": jnp.ones((1, fc1_dims), jnp.float32),
        "beta1": jnp.zeros((1, fc1_dims), jnp.float32),
        "w2": u(ks[2], (fc1_dims, fc2_dims), f2),
        "b2": u(ks[3], (1, fc2_dims), f2),
        "g2": jnp.ones((1, fc2_dims), jnp.float32),
        "beta2": jnp.zeros((1, fc2_dims), jnp.float32),
        "wa": u(ks[4], (n_actions, fc2_dims), fa),
        "ba": u(ks[5], (1, fc2_dims), fa),
        "wq": u(ks[6], (fc2_dims, 1), f3),
        "bq": u(ks[7], (1, 1), f3),
    }


def prepare_params(p):
    """Pad feature dims to lane multiples of 128, cast matmul weights to bf16,
    and pack the small per-feature parameter vectors into two f32 arrays.

    Padded lanes of every per-feature parameter are zero, so LN stats (divided
    by the TRUE counts in-kernel) and all downstream math are unchanged.
    Call once outside the training/inference loop.
    """
    fc1 = p["w1"].shape[1]
    fc2 = p["w2"].shape[1]
    fc1p = _round_up(fc1, 128)
    fc2p = _round_up(fc2, 128)

    def pad_cols(x, n):
        return jnp.pad(x, ((0, 0), (0, n - x.shape[1])))

    def pad2(x, r, c):
        return jnp.pad(x, ((0, r - x.shape[0]), (0, c - x.shape[1])))

    # p1 rows: [b1; g1; beta1]                    -> [3, fc1p]
    # p2 rows: [b2; g2; beta2; ba; wq^T; wa rows] -> [5 + n_actions, fc2p]
    p1 = jnp.concatenate(
        [pad_cols(p["b1"], fc1p), pad_cols(p["g1"], fc1p),
         pad_cols(p["beta1"], fc1p)], axis=0).astype(jnp.float32)
    p2 = jnp.concatenate(
        [pad_cols(p["b2"], fc2p), pad_cols(p["g2"], fc2p),
         pad_cols(p["beta2"], fc2p), pad_cols(p["ba"], fc2p),
         pad_cols(p["wq"].T, fc2p), pad_cols(p["wa"], fc2p)],
        axis=0).astype(jnp.float32)

    return {
        "w1": pad_cols(p["w1"], fc1p).astype(jnp.bfloat16),
        "w2": pad2(p["w2"], fc1p, fc2p).astype(jnp.bfloat16),
        "p1": p1,
        "p2": p2,
        "bq": p["bq"],            # scalar bias, folded in by the wrapper
    }


def ddpg_critic_forward(state, action, prepared, *, fc1_dims, fc2_dims,
                        tb=1024, bf16_epilogue=None):
    """state: [B, input_dims] f32, action: [B, n_actions] f32 -> [B, 1] f32."""
    pp = prepared
    B, in_dims = state.shape
    n_actions = action.shape[1]
    if bf16_epilogue is None:
        bf16_epilogue = _supports_bf16_epilogue()

    TB = _choose_tb(B, tb)
    Bp = _round_up(B, TB)
    G = Bp // TB
    if Bp != B:
        state = jnp.pad(state, ((0, Bp - B), (0, 0)))
        action = jnp.pad(action, ((0, Bp - B), (0, 0)))

    kernel = functools.partial(
        ddpg_critic_kernel, n1=fc1_dims, n2=fc2_dims,
        n_actions=n_actions, bf16_epilogue=bool(bf16_epilogue))

    def resident(a):
        # Whole-array block + constant index -> stays VMEM-resident across tiles.
        return pl.BlockSpec(a.shape, lambda i: (0,) * a.ndim)

    args = (state, action, pp["w1"], pp["w2"], pp["p1"], pp["p2"])
    in_specs = [
        pl.BlockSpec((TB, in_dims), lambda i: (i, 0)),
        pl.BlockSpec((TB, n_actions), lambda i: (i, 0)),
    ] + [resident(a) for a in args[2:]]

    out = pl.pallas_call(
        kernel,
        out_shape=jax.ShapeDtypeStruct((G, 1, TB), jnp.float32),
        grid=(G,),
        in_specs=in_specs,
        out_specs=pl.BlockSpec((1, 1, TB), lambda i: (i, 0, 0)),
        compiler_params=pltpu.CompilerParams(
            dimension_semantics=("parallel",),       # shards tiles across TCs on v7x
            vmem_limit_bytes=48 * 1024 * 1024),      # headroom for TB>=1024 on v5e
    )(*args)

    # Lane-dense [G, 1, TB] rows -> [B, 1] column; fold in the scalar Q bias here.
    return out.reshape(Bp, 1)[:B] + pp["bq"]


def reference_matched(state, action, pp, n1, n2, n_actions, bf16_epilogue):
    """Precision-matched reference: same packed params, same cast points as kernel."""
    eps = jnp.float32(1e-5)
    inv_n1 = jnp.float32(1.0 / n1)
    inv_n2 = jnp.float32(1.0 / n2)
    edt = jnp.bfloat16 if bf16_epilogue else jnp.float32
    p1, p2 = pp["p1"], pp["p2"]
    b1, g1, beta1 = p1[0:1], p1[1:2].astype(edt), p1[2:3].astype(edt)
    b2, g2, beta2 = p2[0:1], p2[1:2].astype(edt), p2[2:3].astype(edt)
    ba, wq = p2[3:4].astype(edt), p2[4:5]
    wa = p2[5:5 + n_actions].astype(edt)

    h1 = jnp.dot(state.astype(jnp.bfloat16), pp["w1"],
                 preferred_element_type=jnp.float32) + b1
    mu1 = h1.sum(-1, keepdims=True) * inv_n1
    var1 = (h1 * h1).sum(-1, keepdims=True) * inv_n1 - mu1 * mu1
    inv1 = jax.lax.rsqrt(var1 + eps)
    h1n = (h1.astype(edt) - mu1.astype(edt)) * inv1.astype(edt) * g1 + beta1
    h1n = jnp.maximum(h1n, 0).astype(jnp.bfloat16)

    h2 = jnp.dot(h1n, pp["w2"], preferred_element_type=jnp.float32) + b2
    mu2 = h2.sum(-1, keepdims=True) * inv_n2
    var2 = (h2 * h2).sum(-1, keepdims=True) * inv_n2 - mu2 * mu2
    inv2 = jax.lax.rsqrt(var2 + eps)
    h2n = (h2.astype(edt) - mu2.astype(edt)) * inv2.astype(edt) * g2 + beta2

    av = ba + action[:, 0:1].astype(edt) * wa[0:1, :]
    for k in range(1, n_actions):
        av = av + action[:, k:k + 1].astype(edt) * wa[k:k + 1, :]
    av = jnp.maximum(av, 0)

    sav = jnp.maximum(h2n + av, 0)
    q = jnp.sum(sav.astype(jnp.float32) * wq, axis=-1, keepdims=True)
    return q + pp["bq"]


def reference_f32(state, action, p):
    """Pure-f32 reference matching the original PyTorch module exactly."""
    eps = 1e-5
    h1 = state @ p["w1"] + p["b1"]
    mu = h1.mean(-1, keepdims=True)
    var = ((h1 - mu) ** 2).mean(-1, keepdims=True)
    h1 = jnp.maximum((h1 - mu) / jnp.sqrt(var + eps) * p["g1"] + p["beta1"], 0.0)
    h2 = h1 @ p["w2"] + p["b2"]
    mu = h2.mean(-1, keepdims=True)
    var = ((h2 - mu) ** 2).mean(-1, keepdims=True)
    h2 = (h2 - mu) / jnp.sqrt(var + eps) * p["g2"] + p["beta2"]
    av = jnp.maximum(action @ p["wa"] + p["ba"], 0.0)
    sav = jnp.maximum(h2 + av, 0.0)
    return sav @ p["wq"] + p["bq"]


if __name__ == "__main__":
    B, IN_DIMS, FC1, FC2, N_ACT = 8, 8, 400, 300, 2

    key = jax.random.PRNGKey(0)
    k_state, k_action, k_params, k_state2, k_action2 = jax.random.split(key, 5)

    params = init_params(k_params, IN_DIMS, FC1, FC2, N_ACT)
    prepared = prepare_params(params)   # done once, reused every forward call

    state = jax.random.normal(k_state, (B, IN_DIMS), jnp.float32)
    action = jax.random.normal(k_action, (B, N_ACT), jnp.float32)

    # f32 epilogue always; bf16 epilogue additionally where the VPU supports it.
    modes = [False] + ([True] if _supports_bf16_epilogue() else [])
    for bf16_epi in modes:
        q = ddpg_critic_forward(state, action, prepared, fc1_dims=FC1, fc2_dims=FC2,
                                bf16_epilogue=bf16_epi)
        q = jax.block_until_ready(q)
        assert q.shape == (B, 1), q.shape
        q_ref = reference_matched(state, action, prepared, FC1, FC2, N_ACT, bf16_epi)
        assert jnp.allclose(q, q_ref, atol=5e-4, rtol=1e-2), (bf16_epi, q, q_ref)
        q_f32 = reference_f32(state, action, params)
        assert jnp.allclose(q, q_f32, atol=5e-3, rtol=5e-2), (bf16_epi, q, q_f32)

    # Medium batch: exercises batch padding, a 2-tile "parallel" grid, and the
    # lane-dense TB=256 output path, with the auto-detected epilogue dtype.
    B2 = 300
    state2 = jax.random.normal(k_state2, (B2, IN_DIMS), jnp.float32)
    action2 = jax.random.normal(k_action2, (B2, N_ACT), jnp.float32)
    q2 = jax.block_until_ready(
        ddpg_critic_forward(state2, action2, prepared, fc1_dims=FC1, fc2_dims=FC2))
    assert q2.shape == (B2, 1), q2.shape
    q2_ref = reference_matched(state2, action2, prepared, FC1, FC2, N_ACT,
                               _supports_bf16_epilogue())
    assert jnp.allclose(q2, q2_ref, atol=5e-4, rtol=1e-2), (q2, q2_ref)
    q2_f32 = reference_f32(state2, action2, params)
    assert jnp.allclose(q2, q2_f32, atol=5e-3, rtol=5e-2), (q2, q2_f32)

    print("KERNEL_OK")
</pallas_src>

<mosaic_0001>
module attributes {stable_mosaic.version = 11 : i64} {
  func.func @ddpg_critic_kernel(%arg0: i32, %arg1: memref<8x8xf32, #tpu.memory_space<vmem>>, %arg2: memref<8x2xf32, #tpu.memory_space<vmem>>, %arg3: memref<8x512xbf16, #tpu.memory_space<vmem>>, %arg4: memref<512x384xbf16, #tpu.memory_space<vmem>>, %arg5: memref<3x512xf32, #tpu.memory_space<vmem>>, %arg6: memref<7x384xf32, #tpu.memory_space<vmem>>, %arg7: memref<1x1x8xf32, #tpu.memory_space<vmem>>) attributes {dimension_semantics = [#tpu.dimension_semantics<parallel>], iteration_bounds = array<i64: 1>, scalar_prefetch = 0 : i64, scratch_operands = 0 : i64, tpu.core_type = #tpu.core_type<tc>, window_params = [{transform_indices = @transform_0, window_bounds = array<i64: 8, 8>}, {transform_indices = @transform_1, window_bounds = array<i64: 8, 2>}, {pipeline_mode = #tpu.pipeline_mode<synchronous>, transform_indices = @transform_2, window_bounds = array<i64: 8, 512>}, {pipeline_mode = #tpu.pipeline_mode<synchronous>, transform_indices = @transform_3, window_bounds = array<i64: 512, 384>}, {pipeline_mode = #tpu.pipeline_mode<synchronous>, transform_indices = @transform_4, window_bounds = array<i64: 3, 512>}, {pipeline_mode = #tpu.pipeline_mode<synchronous>, transform_indices = @transform_5, window_bounds = array<i64: 7, 384>}, {transform_indices = @transform_6, window_bounds = array<i64: 1, 1, 8>}]} {
    %c0 = arith.constant 0 : index
    %c0_0 = arith.constant 0 : index
    %0 = vector.load %arg5[%c0, %c0_0] : memref<3x512xf32, #tpu.memory_space<vmem>>, vector<1x512xf32>
    %c1 = arith.constant 1 : index
    %c0_1 = arith.constant 0 : index
    %1 = vector.load %arg5[%c1, %c0_1] : memref<3x512xf32, #tpu.memory_space<vmem>>, vector<1x512xf32>
    %c2 = arith.constant 2 : index
    %c0_2 = arith.constant 0 : index
    %2 = vector.load %arg5[%c2, %c0_2] : memref<3x512xf32, #tpu.memory_space<vmem>>, vector<1x512xf32>
    %c0_3 = arith.constant 0 : index
    %c0_4 = arith.constant 0 : index
    %3 = vector.load %arg6[%c0_3, %c0_4] : memref<7x384xf32, #tpu.memory_space<vmem>>, vector<1x384xf32>
    %c1_5 = arith.constant 1 : index
    %c0_6 = arith.constant 0 : index
    %4 = vector.load %arg6[%c1_5, %c0_6] : memref<7x384xf32, #tpu.memory_space<vmem>>, vector<1x384xf32>
    %c2_7 = arith.constant 2 : index
    %c0_8 = arith.constant 0 : index
    %5 = vector.load %arg6[%c2_7, %c0_8] : memref<7x384xf32, #tpu.memory_space<vmem>>, vector<1x384xf32>
    %c3 = arith.constant 3 : index
    %c0_9 = arith.constant 0 : index
    %6 = vector.load %arg6[%c3, %c0_9] : memref<7x384xf32, #tpu.memory_space<vmem>>, vector<1x384xf32>
    %c4 = arith.constant 4 : index
    %c0_10 = arith.constant 0 : index
    %7 = vector.load %arg6[%c4, %c0_10] : memref<7x384xf32, #tpu.memory_space<vmem>>, vector<1x384xf32>
    %c5 = arith.constant 5 : index
    %c0_11 = arith.constant 0 : index
    %8 = vector.load %arg6[%c5, %c0_11] : memref<7x384xf32, #tpu.memory_space<vmem>>, vector<2x384xf32>
    %c0_12 = arith.constant 0 : index
    %c0_13 = arith.constant 0 : index
    %9 = vector.load %arg1[%c0_12, %c0_13] : memref<8x8xf32, #tpu.memory_space<vmem>>, vector<8x8xf32>
    %10 = arith.truncf %9 : vector<8x8xf32> to vector<8x8xbf16>
    %c0_14 = arith.constant 0 : index
    %c0_15 = arith.constant 0 : index
    %11 = vector.load %arg3[%c0_14, %c0_15] : memref<8x512xbf16, #tpu.memory_space<vmem>>, vector<8x512xbf16>
    %cst = arith.constant dense<0.000000e+00> : vector<8x512xf32>
    %12 = tpu.matmul %10, %11, %cst {dimension_numbers = #tpu.dot_dimension_numbers<[1], [0], [0], [1], [0, 0, 1, 1], [], []>} : vector<8x8xbf16>, vector<8x512xbf16>, vector<8x512xf32> -> vector<8x512xf32>
    %13 = vector.broadcast %0 : vector<1x512xf32> to vector<8x512xf32>
    %14 = arith.addf %12, %13 : vector<8x512xf32>
    %cst_16 = arith.constant dense<0.000000e+00> : vector<8xf32>
    %15 = vector.multi_reduction <add>, %14, %cst_16 [1] : vector<8x512xf32> to vector<8xf32>
    %16 = vector.shape_cast %15 : vector<8xf32> to vector<8x1xf32>
    %17 = arith.mulf %14, %14 : vector<8x512xf32>
    %cst_17 = arith.constant dense<0.000000e+00> : vector<8xf32>
    %18 = vector.multi_reduction <add>, %17, %cst_17 [1] : vector<8x512xf32> to vector<8xf32>
    %19 = vector.shape_cast %18 : vector<8xf32> to vector<8x1xf32>
    %cst_18 = arith.constant 2.500000e-03 : f32
    %20 = vector.broadcast %cst_18 : f32 to vector<8x1xf32>
    %21 = arith.mulf %16, %20 : vector<8x1xf32>
    %cst_19 = arith.constant 2.500000e-03 : f32
    %22 = vector.broadcast %cst_19 : f32 to vector<8x1xf32>
    %23 = arith.mulf %19, %22 : vector<8x1xf32>
    %24 = arith.mulf %21, %21 : vector<8x1xf32>
    %25 = arith.subf %23, %24 : vector<8x1xf32>
    %cst_20 = arith.constant 9.99999974E-6 : f32
    %26 = vector.broadcast %cst_20 : f32 to vector<8x1xf32>
    %27 = arith.addf %25, %26 : vector<8x1xf32>
    %28 = math.rsqrt %27 : vector<8x1xf32>
    %29 = vector.broadcast %21 : vector<8x1xf32> to vector<8x512xf32>
    %30 = arith.subf %14, %29 : vector<8x512xf32>
    %31 = vector.broadcast %28 : vector<8x1xf32> to vector<8x512xf32>
    %32 = arith.mulf %30, %31 : vector<8x512xf32>
    %33 = vector.broadcast %1 : vector<1x512xf32> to vector<8x512xf32>
    %34 = arith.mulf %32, %33 : vector<8x512xf32>
    %35 = vector.broadcast %2 : vector<1x512xf32> to vector<8x512xf32>
    %36 = arith.addf %34, %35 : vector<8x512xf32>
    %cst_21 = arith.constant 0.000000e+00 : f32
    %37 = vector.broadcast %cst_21 : f32 to vector<8x512xf32>
    %38 = arith.maximumf %36, %37 : vector<8x512xf32>
    %39 = arith.truncf %38 : vector<8x512xf32> to vector<8x512xbf16>
    %c0_22 = arith.constant 0 : index
    %c0_23 = arith.constant 0 : index
    %40 = vector.load %arg4[%c0_22, %c0_23] : memref<512x384xbf16, #tpu.memory_space<vmem>>, vector<512x384xbf16>
    %cst_24 = arith.constant dense<0.000000e+00> : vector<8x384xf32>
    %41 = tpu.matmul %39, %40, %cst_24 {dimension_numbers = #tpu.dot_dimension_numbers<[1], [0], [0], [1], [0, 0, 1, 1], [], []>} : vector<8x512xbf16>, vector<512x384xbf16>, vector<8x384xf32> -> vector<8x384xf32>
    %42 = vector.broadcast %3 : vector<1x384xf32> to vector<8x384xf32>
    %43 = arith.addf %41, %42 : vector<8x384xf32>
    %cst_25 = arith.constant dense<0.000000e+00> : vector<8xf32>
    %44 = vector.multi_reduction <add>, %43, %cst_25 [1] : vector<8x384xf32> to vector<8xf32>
    %45 = vector.shape_cast %44 : vector<8xf32> to vector<8x1xf32>
    %46 = arith.mulf %43, %43 : vector<8x384xf32>
    %cst_26 = arith.constant dense<0.000000e+00> : vector<8xf32>
    %47 = vector.multi_reduction <add>, %46, %cst_26 [1] : vector<8x384xf32> to vector<8xf32>
    %48 = vector.shape_cast %47 : vector<8xf32> to vector<8x1xf32>
    %cst_27 = arith.constant 0.00333333341 : f32
    %49 = vector.broadcast %cst_27 : f32 to vector<8x1xf32>
    %50 = arith.mulf %45, %49 : vector<8x1xf32>
    %cst_28 = arith.constant 0.00333333341 : f32
    %51 = vector.broadcast %cst_28 : f32 to vector<8x1xf32>
    %52 = arith.mulf %48, %51 : vector<8x1xf32>
    %53 = arith.mulf %50, %50 : vector<8x1xf32>
    %54 = arith.subf %52, %53 : vector<8x1xf32>
    %cst_29 = arith.constant 9.99999974E-6 : f32
    %55 = vector.broadcast %cst_29 : f32 to vector<8x1xf32>
    %56 = arith.addf %54, %55 : vector<8x1xf32>
    %57 = math.rsqrt %56 : vector<8x1xf32>
    %58 = vector.broadcast %50 : vector<8x1xf32> to vector<8x384xf32>
    %59 = arith.subf %43, %58 : vector<8x384xf32>
    %60 = vector.broadcast %57 : vector<8x1xf32> to vector<8x384xf32>
    %61 = arith.mulf %59, %60 : vector<8x384xf32>
    %62 = vector.broadcast %4 : vector<1x384xf32> to vector<8x384xf32>
    %63 = arith.mulf %61, %62 : vector<8x384xf32>
    %64 = vector.broadcast %5 : vector<1x384xf32> to vector<8x384xf32>
    %65 = arith.addf %63, %64 : vector<8x384xf32>
    %c0_30 = arith.constant 0 : index
    %c0_31 = arith.constant 0 : index
    %66 = vector.load %arg2[%c0_30, %c0_31] : memref<8x2xf32, #tpu.memory_space<vmem>>, vector<8x2xf32>
    %67 = vector.extract_strided_slice %66 {offsets = [0, 0], sizes = [8, 1], strides = [1, 1]} : vector<8x2xf32> to vector<8x1xf32>
    %68 = vector.extract_strided_slice %8 {offsets = [0, 0], sizes = [1, 384], strides = [1, 1]} : vector<2x384xf32> to vector<1x384xf32>
    %69 = vector.broadcast %67 : vector<8x1xf32> to vector<8x384xf32>
    %70 = vector.broadcast %68 : vector<1x384xf32> to vector<8x384xf32>
    %71 = arith.mulf %69, %70 : vector<8x384xf32>
    %72 = vector.broadcast %6 : vector<1x384xf32> to vector<8x384xf32>
    %73 = arith.addf %72, %71 : vector<8x384xf32>
    %74 = vector.extract_strided_slice %66 {offsets = [0, 1], sizes = [8, 1], strides = [1, 1]} : vector<8x2xf32> to vector<8x1xf32>
    %75 = vector.extract_strided_slice %8 {offsets = [1, 0], sizes = [1, 384], strides = [1, 1]} : vector<2x384xf32> to vector<1x384xf32>
    %76 = vector.broadcast %74 : vector<8x1xf32> to vector<8x384xf32>
    %77 = vector.broadcast %75 : vector<1x384xf32> to vector<8x384xf32>
    %78 = arith.mulf %76, %77 : vector<8x384xf32>
    %79 = arith.addf %73, %78 : vector<8x384xf32>
    %cst_32 = arith.constant 0.000000e+00 : f32
    %80 = vector.broadcast %cst_32 : f32 to vector<8x384xf32>
    %81 = arith.maximumf %79, %80 : vector<8x384xf32>
    %82 = arith.addf %65, %81 : vector<8x384xf32>
    %cst_33 = arith.constant 0.000000e+00 : f32
    %83 = vector.broadcast %cst_33 : f32 to vector<8x384xf32>
    %84 = arith.maximumf %82, %83 : vector<8x384xf32>
    %85 = vector.broadcast %7 : vector<1x384xf32> to vector<8x384xf32>
    %86 = arith.mulf %84, %85 : vector<8x384xf32>
    %cst_34 = arith.constant dense<0.000000e+00> : vector<8xf32>
    %87 = vector.multi_reduction <add>, %86, %cst_34 [1] : vector<8x384xf32> to vector<8xf32>
    %88 = vector.shape_cast %87 : vector<8xf32> to vector<1x1x8xf32>
    %c0_35 = arith.constant 0 : index
    %c0_36 = arith.constant 0 : index
    %c0_37 = arith.constant 0 : index
    %89 = vector.load %arg7[%c0_35, %c0_36, %c0_37] : memref<1x1x8xf32, #tpu.memory_space<vmem>>, vector<1x1x8xf32>
    tpu.vector_store %arg7[%c0_35, %c0_36, %c0_37], %88 {strides = array<i32>} : memref<1x1x8xf32, #tpu.memory_space<vmem>>, vector<1x1x8xf32>,
    return
  }
  func.func @transform_0(%arg0: i32) -> (i32, i32) {
    %c0_i32 = arith.constant 0 : i32
    %c0_i32_0 = arith.constant 0 : i32
    return %arg0, %c0_i32 : i32, i32
  }
  func.func @transform_1(%arg0: i32) -> (i32, i32) {
    %c0_i32 = arith.constant 0 : i32
    %c0_i32_0 = arith.constant 0 : i32
    return %arg0, %c0_i32 : i32, i32
  }
  func.func @transform_2(%arg0: i32) -> (i32, i32) {
    %c0_i32 = arith.constant 0 : i32
    %c0_i32_0 = arith.constant 0 : i32
    %c0_i32_1 = arith.constant 0 : i32
    return %c0_i32, %c0_i32_0 : i32, i32
  }
  func.func @transform_3(%arg0: i32) -> (i32, i32) {
    %c0_i32 = arith.constant 0 : i32
    %c0_i32_0 = arith.constant 0 : i32
    %c0_i32_1 = arith.constant 0 : i32
    return %c0_i32, %c0_i32_0 : i32, i32
  }
  func.func @transform_4(%arg0: i32) -> (i32, i32) {
    %c0_i32 = arith.constant 0 : i32
    %c0_i32_0 = arith.constant 0 : i32
    %c0_i32_1 = arith.constant 0 : i32
    return %c0_i32, %c0_i32_0 : i32, i32
  }
  func.func @transform_5(%arg0: i32) -> (i32, i32) {
    %c0_i32 = arith.constant 0 : i32
    %c0_i32_0 = arith.constant 0 : i32
    %c0_i32_1 = arith.constant 0 : i32
    return %c0_i32, %c0_i32_0 : i32, i32
  }
  func.func @transform_6(%arg0: i32) -> (i32, i32, i32) {
    %c0_i32 = arith.constant 0 : i32
    %c0_i32_0 = arith.constant 0 : i32
    %c0_i32_1 = arith.constant 0 : i32
    return %arg0, %c0_i32, %c0_i32_0 : i32, i32, i32
  }
}

</mosaic_0001>

<llo_original>
// kernel: tpu_custom_call.1
$region0: #{tpu_custom_call.1}
  #allocation0 [shape = 'u32[]', space=smem, size = 0x4, offset = 0x4, fixed_abs, tag = 'smem constant byte address 0x4 - core index']
  #allocation1 [shape = 'u32[144,128]{1,0:T(1,128)}', space=vmem, size = 0x12000, scoped, tag = 'internal scratch']
  %s0 = inlined_call_operand.hbm [shape: f32[8,8], index: 0, kind: input, shape index: {}]
  %s1 = inlined_call_operand.vmem [shape: f32[8,2], index: 1, kind: input, shape index: {}]
  %s2 = inlined_call_operand.hbm [shape: bf16[8,512], index: 2, kind: input, shape index: {}]
  %s3 = inlined_call_operand.hbm [shape: bf16[512,384], index: 3, kind: input, shape index: {}]
  %s4 = inlined_call_operand.hbm [shape: f32[3,512], index: 4, kind: input, shape index: {}]
  %s5 = inlined_call_operand.vmem [shape: f32[7,384], index: 5, kind: input, shape index: {}]
  %s6 = inlined_call_operand.hbm [shape: f32[1,1,8], index: 6, kind: output, shape index: {}]
  %s7 = sld [smem:[#allocation0]]
  $region50: #{tpu_custom_call.1} parent=0
    _
  %s9 = ssub.s32 1, %s7
  %s10 = scalar_select 0, %s9, %s7
  $region1: #{tpu_custom_call.1} parent=0
    #allocation2 [shape = 'u8[4096]{0}', space=vmem, size = 0x1000, scoped, tag = 'input window, operand 0, single buffered']
    #allocation3 [shape = 's32[1]{0}', space=sflag, size = 0x4, scoped, tag = 'scoped memory for tpu_custom_call.1']
    #allocation4 [shape = 's32[1]{0}', space=sflag, size = 0x4, scoped, tag = 'scoped memory for tpu_custom_call.1']
    #allocation5 [shape = 'u8[8192]{0}', space=vmem, size = 0x2000, scoped, tag = 'input window, operand 2, single buffered']
    #allocation6 [shape = 's32[1]{0}', space=sflag, size = 0x4, scoped, tag = 'scoped memory for tpu_custom_call.1']
    #allocation7 [shape = 'u8[393216]{0}', space=vmem, size = 0x60000, scoped, tag = 'input window, operand 3, single buffered']
    #allocation8 [shape = 'u8[8192]{0}', space=vmem, size = 0x2000, scoped, tag = 'input window, operand 4, single buffered']
    #allocation9 [shape = 's32[1]{0}', space=sflag, size = 0x4, scoped, tag = 'scoped memory for tpu_custom_call.1']
    #allocation10 [shape = 'u8[512]{0}', space=vmem, size = 0x400, scoped, tag = 'output window, operand 0, single buffered']
    %11 = vsyncpa [#allocation3], 0
    %12 = vsyncpa [#allocation6], 0
    %13 = vsyncpa [#allocation9], 0
    %14 = vsyncpa [#allocation4], 0
    // Predicated region
    $region2: #{tpu_custom_call.1} parent=1 // pred_check
      _
    $region3: #{tpu_custom_call.1} parent=1 // pred_check_branch
      %16 = sbr.rel (0) target = $region5
    $region4: #{tpu_custom_call.1} parent=1 // pred_region
      %s18 = ssub.s32 128, 128
      %19 = vsyncadd [#allocation3], %s18
      %s21 = sshll.u32 [#allocation2], 4
      %s22 = int_to_ptr.vmem [resolvable:$true] %s21
      %24 = dma.hbm_to_vmem [thread:$0]  %s0, 128, %s22, [#allocation3]
    $region5: #{tpu_custom_call.1} parent=1 // pred_fallthru
      _
    // Predicated region
    $region6: #{tpu_custom_call.1} parent=1 // pred_check
      _
    $region7: #{tpu_custom_call.1} parent=1 // pred_check_branch
      %26 = sbr.rel (0) target = $region9
    $region8: #{tpu_custom_call.1} parent=1 // pred_region
      _
    $region9: #{tpu_custom_call.1} parent=1 // pred_fallthru
      _
    // Predicated region
    $region10: #{tpu_custom_call.1} parent=1 // pred_check
      _
    $region11: #{tpu_custom_call.1} parent=1 // pred_check_branch
      %28 = sbr.rel (0) target = $region13
    $region12: #{tpu_custom_call.1} parent=1 // pred_region
      %s30 = ssub.s32 256, 256
      %31 = vsyncadd [#allocation6], %s30
      %s33 = sshll.u32 [#allocation5], 4
      %s34 = int_to_ptr.vmem [resolvable:$true] %s33
      %36 = dma.hbm_to_vmem [thread:$0]  %s2, 256, %s34, [#allocation6]
    $region13: #{tpu_custom_call.1} parent=1 // pred_fallthru
      _
    // Predicated region
    $region14: #{tpu_custom_call.1} parent=1 // pred_check
      _
    $region15: #{tpu_custom_call.1} parent=1 // pred_check_branch
      %38 = sbr.rel (0) target = $region17
    $region16: #{tpu_custom_call.1} parent=1 // pred_region
      %s40 = ssub.s32 12288, 12288
      %41 = vsyncadd [#allocation6], %s40
      %s42 = sshll.u32 [#allocation7], 4
      %s43 = int_to_ptr.vmem [resolvable:$true] %s42
      %48 = dma.hbm_to_vmem [thread:$0]  %s3, 12288, %s43, [#allocation6], 192, 192, 12
    $region17: #{tpu_custom_call.1} parent=1 // pred_fallthru
      _
    // Predicated region
    $region18: #{tpu_custom_call.1} parent=1 // pred_check
      _
    $region19: #{tpu_custom_call.1} parent=1 // pred_check_branch
      %50 = sbr.rel (0) target = $region21
    $region20: #{tpu_custom_call.1} parent=1 // pred_region
      %s52 = ssub.s32 256, 256
      %53 = vsyncadd [#allocation9], %s52
      %s55 = sshll.u32 [#allocation8], 4
      %s56 = int_to_ptr.vmem [resolvable:$true] %s55
      %58 = dma.hbm_to_vmem [thread:$0]  %s4, 256, %s56, [#allocation9]
    $region21: #{tpu_custom_call.1} parent=1 // pred_fallthru
      _
    // Predicated region
    $region22: #{tpu_custom_call.1} parent=1 // pred_check
      _
    $region23: #{tpu_custom_call.1} parent=1 // pred_check_branch
      %60 = sbr.rel (0) target = $region25
    $region24: #{tpu_custom_call.1} parent=1 // pred_region
      _
    $region25: #{tpu_custom_call.1} parent=1 // pred_fallthru
      _
    // Predicated region
    $region26: #{tpu_custom_call.1} parent=1 // pred_check
      _
    $region27: #{tpu_custom_call.1} parent=1 // pred_check_branch
      %62 = sbr.rel (0) target = $region29
    $region28: #{tpu_custom_call.1} parent=1 // pred_region
      %63 = dma.done [#allocation3], 128
    $region29: #{tpu_custom_call.1} parent=1 // pred_fallthru
      _
    // Predicated region
    $region30: #{tpu_custom_call.1} parent=1 // pred_check
      _
    $region31: #{tpu_custom_call.1} parent=1 // pred_check_branch
      %65 = sbr.rel (0) target = $region33
    $region32: #{tpu_custom_call.1} parent=1 // pred_region
      %66 = dma.done [#allocation6], 256
    $region33: #{tpu_custom_call.1} parent=1 // pred_fallthru
      _
    // Predicated region
    $region34: #{tpu_custom_call.1} parent=1 // pred_check
      _
    $region35: #{tpu_custom_call.1} parent=1 // pred_check_branch
      %68 = sbr.rel (0) target = $region37
    $region36: #{tpu_custom_call.1} parent=1 // pred_region
      %69 = dma.done [#allocation6], 12288
    $region37: #{tpu_custom_call.1} parent=1 // pred_fallthru
      _
    // Predicated region
    $region38: #{tpu_custom_call.1} parent=1 // pred_check
      _
    $region39: #{tpu_custom_call.1} parent=1 // pred_check_branch
      %71 = sbr.rel (0) target = $region41
    $region40: #{tpu_custom_call.1} parent=1 // pred_region
      %72 = dma.done [#allocation9], 256
    $region41: #{tpu_custom_call.1} parent=1 // pred_fallthru
      _
    %v74 = vld [vmem:[#allocation8] ss:$4 sm:$0xf]
    %s75 = scalar_lea.vmem [#allocation8], 1
    %v76 = vld [vmem:[%s75] ss:$4 sm:$0xf]
    %s77 = scalar_lea.vmem [#allocation8], 2
    %v78 = vld [vmem:[%s77] ss:$4 sm:$0xf]
    %v79 = vld [vmem:[%s5] ss:$8 sm:$0x7]
    %s80 = scalar_lea.vmem %s5, 1
    %v81 = vld [vmem:[%s80] ss:$8 sm:$0x7]
    %s82 = scalar_lea.vmem %s5, 2
    %v83 = vld [vmem:[%s82] ss:$8 sm:$0x7]
    %s84 = scalar_lea.vmem %s5, 3
    %v85 = vld [vmem:[%s84] ss:$8 sm:$0x7]
    %s86 = scalar_lea.vmem %s5, 4
    %v87 = vld [vmem:[%s86] ss:$8 sm:$0x7]
    %v88 = vld [vmem:[%s5] sm:$0x60]
    %v89 = vld [vmem:[%s5 + $0x8] sm:$0x60]
    %v90 = vld [vmem:[%s5 + $0x10] sm:$0x60]
    %v91 = vld [vmem:[#allocation2] sm:$0xff]
    %v92 = vpack.c.bf16 %v91, %v91
    %v93 = vld [vmem:[#allocation5] sm:$0xff]
    %v94 = vld [vmem:[#allocation5 + $0x8] sm:$0xff]
    %v96 = vlaneseq
    %v97 = vshrl.u32 %v96, 7
    %v98 = vsub.s32 0, %v97
    %v99 = vrot.slane %v74, %v98
    %v100 = vlaneseq
    %v101 = vshrl.u32 %v100, 7
    %v102 = vsub.s32 1, %v101
    %v103 = vrot.slane %v74, %v102
    %v104 = vlaneseq
    %v105 = vshrl.u32 %v104, 7
    %v106 = vsub.s32 2, %v105
    %v107 = vrot.slane %v74, %v106
    %v108 = vlaneseq
    %v109 = vshrl.u32 %v108, 7
    %v110 = vsub.s32 3, %v109
    %v111 = vrot.slane %v74, %v110
    %v118 = vunpack.c.l.b16 %v93
    %v119 = vunpack.c.h.b16 %v93
    %v120 = vunpack.c.l.b16 %v94
    %v121 = vunpack.c.h.b16 %v94
    %v122 = vpack.c.b16 %v118, %v118
    %v123 = vpack.c.b16 %v119, %v119
    %v124 = vpack.c.b16 %v120, %v120
    %v125 = vpack.c.b16 %v121, %v121
    %vm126 = vcmask 64512
    %v128 = vsel %vm126, %v92, 0
    %vm130 = vcmask 1043456
    %v132 = vsel %vm130, %v122, 0
    %v135 = vsel %vm130, %v123, 0
    %v138 = vsel %vm130, %v124, 0
    %v141 = vsel %vm130, %v125, 0
    %143 = vmatprep.subr.bf16.mxu0 %v135
    %144 = vmatpush1.bf16.msra.mxu0 %v132
    %145 = vmatprep.subr.bf16.mxu0 0
    %146 = vmatpush1.bf16.msra.mxu0 0
    %147 = vmatprep.subr.bf16.mxu0 0
    %148 = vmatpush1.bf16.msra.mxu0 0
    %149 = vmatprep.subr.bf16.mxu0 0
    %150 = vmatpush1.bf16.msra.mxu0 0
    %151 = vmatprep.subr.bf16.mxu0 0
    %152 = vmatpush1.bf16.msra.mxu0 0
    %153 = vmatprep.subr.bf16.mxu0 0
    %154 = vmatpush1.bf16.msra.mxu0 0
    %155 = vmatprep.subr.bf16.mxu0 0
    %156 = vmatpush1.bf16.msra.mxu0 0
    %157 = vmatprep.subr.bf16.mxu0 0
    %158 = vmatpush1.bf16.msra.mxu0 0
    %159 = vmatprep.subr.bf16.mxu0 0
    %160 = vmatpush1.bf16.msra.mxu0 0
    %161 = vmatprep.subr.bf16.mxu0 0
    %162 = vmatpush1.bf16.msra.mxu0 0
    %163 = vmatprep.subr.bf16.mxu0 0
    %164 = vmatpush1.bf16.msra.mxu0 0
    %165 = vmatprep.subr.bf16.mxu0 0
    %166 = vmatpush1.bf16.msra.mxu0 0
    %167 = vmatprep.subr.bf16.mxu0 0
    %168 = vmatpush1.bf16.msra.mxu0 0
    %169 = vmatprep.subr.bf16.mxu0 0
    %170 = vmatpush1.bf16.msra.mxu0 0
    %171 = vmatprep.subr.bf16.mxu0 0
    %172 = vmatpush1.bf16.msra.mxu0 0
    %173 = vmatprep.subr.bf16.mxu0 0
    %174 = vmatpush1.bf16.msra.mxu0 0
    %175 = vmatprep.mubr.bf16.mxu0 0
    %176 = vmatmul.mubr.bf16.gmra.mrb[0].mxu0 %v128
    %v177 = vpop.f32.mrb[0].mxu0
    %v178 = vadd.f32 %v99, %v177
    %v179 = vpop.f32.mrb[0].mxu0
    %v180 = vadd.f32 %v103, %v179
    %v181 = vpop.f32.mrb[0].mxu0
    %v182 = vpop.f32.mrb[0].mxu0
    %183 = vdwg.mxu0
    %184 = vmatprep.subr.bf16.mxu0 %v141
    %185 = vmatpush1.bf16.msra.mxu0 %v138
    %186 = vmatprep.subr.bf16.mxu0 0
    %187 = vmatpush1.bf16.msra.mxu0 0
    %188 = vmatprep.subr.bf16.mxu0 0
    %189 = vmatpush1.bf16.msra.mxu0 0
    %190 = vmatprep.subr.bf16.mxu0 0
    %191 = vmatpush1.bf16.msra.mxu0 0
    %192 = vmatprep.subr.bf16.mxu0 0
    %193 = vmatpush1.bf16.msra.mxu0 0
    %194 = vmatprep.subr.bf16.mxu0 0
    %195 = vmatpush1.bf16.msra.mxu0 0
    %196 = vmatprep.subr.bf16.mxu0 0
    %197 = vmatpush1.bf16.msra.mxu0 0
    %198 = vmatprep.subr.bf16.mxu0 0
    %199 = vmatpush1.bf16.msra.mxu0 0
    %200 = vmatprep.subr.bf16.mxu0 0
    %201 = vmatpush1.bf16.msra.mxu0 0
    %202 = vmatprep.subr.bf16.mxu0 0
    %203 = vmatpush1.bf16.msra.mxu0 0
    %204 = vmatprep.subr.bf16.mxu0 0
    %205 = vmatpush1.bf16.msra.mxu0 0
    %206 = vmatprep.subr.bf16.mxu0 0
    %207 = vmatpush1.bf16.msra.mxu0 0
    %208 = vmatprep.subr.bf16.mxu0 0
    %209 = vmatpush1.bf16.msra.mxu0 0
    %210 = vmatprep.subr.bf16.mxu0 0
    %211 = vmatpush1.bf16.msra.mxu0 0
    %212 = vmatprep.subr.bf16.mxu0 0
    %213 = vmatpush1.bf16.msra.mxu0 0
    %214 = vmatprep.subr.bf16.mxu0 0
    %215 = vmatpush1.bf16.msra.mxu0 0
    %216 = vmatprep.mubr.bf16.mxu0 0
    %217 = vmatmul.mubr.bf16.gmra.mrb[0].mxu0 %v128
    %v218 = vpop.f32.mrb[0].mxu0
    %v219 = vadd.f32 %v107, %v218
    %v220 = vpop.f32.mrb[0].mxu0
    %v221 = vadd.f32 %v111, %v220
    %v222 = vpop.f32.mrb[0].mxu0
    %v223 = vpop.f32.mrb[0].mxu0
    %224 = vdwg.mxu0
    %v225 = vadd.f32 %v178, %v180
    %v226 = vadd.f32 %v225, %v219
    %v227 = vadd.f32 %v226, %v221
    %228 = vadd.xlane.f32.xlu0 %v227
    %v229 = vpop.xlane.xlu0 %228
    %v230 = vmul.f32 %v178, %v178
    %v231 = vmul.f32 %v180, %v180
    %v232 = vmul.f32 %v219, %v219
    %v233 = vmul.f32 %v221, %v221
    %v234 = vadd.f32 %v230, %v231
    %v235 = vadd.f32 %v234, %v232
    %v236 = vadd.f32 %v235, %v233
    %237 = vadd.xlane.f32.xlu0 %v236
    %v238 = vpop.xlane.xlu0 %237
    %v239 = vmul.f32 %v229, 0.0025
    %v240 = vmul.f32 %v238, 0.0025
    %v241 = vmul.f32 %v239, %v239
    %v242 = vsub.f32 %v240, %v241
    %v243 = vadd.f32 %v242, 1e-05
    %v244 = vrsqrt.pop %v243
    %v245 = vsub.f32 %v178, %v239
    %v246 = vsub.f32 %v180, %v239
    %v247 = vsub.f32 %v219, %v239
    %v248 = vsub.f32 %v221, %v239
    %v249 = vmul.f32 %v245, %v244
    %v250 = vmul.f32 %v246, %v244
    %v251 = vmul.f32 %v247, %v244
    %v252 = vmul.f32 %v248, %v244
    %v254 = vlaneseq
    %v255 = vshrl.u32 %v254, 7
    %v256 = vsub.s32 0, %v255
    %v257 = vrot.slane %v76, %v256
    %v258 = vlaneseq
    %v259 = vshrl.u32 %v258, 7
    %v260 = vsub.s32 1, %v259
    %v261 = vrot.slane %v76, %v260
    %v262 = vlaneseq
    %v263 = vshrl.u32 %v262, 7
    %v264 = vsub.s32 2, %v263
    %v265 = vrot.slane %v76, %v264
    %v266 = vlaneseq
    %v267 = vshrl.u32 %v266, 7
    %v268 = vsub.s32 3, %v267
    %v269 = vrot.slane %v76, %v268
    %v274 = vmul.f32 %v249, %v257
    %v275 = vmul.f32 %v250, %v261
    %v276 = vmul.f32 %v251, %v265
    %v277 = vmul.f32 %v252, %v269
    %v279 = vlaneseq
    %v280 = vshrl.u32 %v279, 7
    %v281 = vsub.s32 0, %v280
    %v282 = vrot.slane %v78, %v281
    %v283 = vlaneseq
    %v284 = vshrl.u32 %v283, 7
    %v285 = vsub.s32 1, %v284
    %v286 = vrot.slane %v78, %v285
    %v287 = vlaneseq
    %v288 = vshrl.u32 %v287, 7
    %v289 = vsub.s32 2, %v288
    %v290 = vrot.slane %v78, %v289
    %v291 = vlaneseq
    %v292 = vshrl.u32 %v291, 7
    %v293 = vsub.s32 3, %v292
    %v294 = vrot.slane %v78, %v293
    %v299 = vadd.f32 %v274, %v282
    %v300 = vadd.f32 %v275, %v286
    %v301 = vadd.f32 %v276, %v290
    %v302 = vadd.f32 %v277, %v294
    %v303 = vmax.f32 %v299, 0.0
    %v304 = vmax.f32 %v300, 0.0
    %v305 = vmax.f32 %v301, 0.0
    %v306 = vmax.f32 %v302, 0.0
    %v307 = vpack.c.bf16 %v303, %v303
    %v308 = vpack.c.bf16 %v304, %v304
    %v309 = vpack.c.bf16 %v305, %v305
    %v310 = vpack.c.bf16 %v306, %v306
    %v311 = vld [vmem:[#allocation7] sm:$0xff]
    %v312 = vld [vmem:[#allocation7 + $0x8] sm:$0xf]
    %v313 = vld [vmem:[#allocation7 + $0xc] sm:$0xff]
    %v314 = vld [vmem:[#allocation7 + $0x14] sm:$0xf]
    %v315 = vld [vmem:[#allocation7 + $0x18] sm:$0xff]
    %v316 = vld [vmem:[#allocation7 + $0x20] sm:$0xf]
    %v317 = vld [vmem:[#allocation7 + $0x24] sm:$0xff]
    %v318 = vld [vmem:[#allocation7 + $0x2c] sm:$0xf]
    %v319 = vld [vmem:[#allocation7 + $0x30] sm:$0xff]
    %v320 = vld [vmem:[#allocation7 + $0x38] sm:$0xf]
    %v321 = vld [vmem:[#allocation7 + $0x3c] sm:$0xff]
    %v322 = vld [vmem:[#allocation7 + $0x44] sm:$0xf]
    %v323 = vld [vmem:[#allocation7 + $0x48] sm:$0xff]
    %v324 = vld [vmem:[#allocation7 + $0x50] sm:$0xf]
    %v325 = vld [vmem:[#allocation7 + $0x54] sm:$0xff]
    %v326 = vld [vmem:[#allocation7 + $0x5c] sm:$0xf]
    %v327 = vld [vmem:[#allocation7 + $0x60] sm:$0xff]
    %v328 = vld [vmem:[#allocation7 + $0x68] sm:$0xf]
    %v329 = vld [vmem:[#allocation7 + $0x6c] sm:$0xff]
    %v330 = vld [vmem:[#allocation7 + $0x74] sm:$0xf]
    %v331 = vld [vmem:[#allocation7 + $0x78] sm:$0xff]
    %v332 = vld [vmem:[#allocation7 + $0x80] sm:$0xf]
    %v333 = vld [vmem:[#allocation7 + $0x84] sm:$0xff]
    %v334 = vld [vmem:[#allocation7 + $0x8c] sm:$0xf]
    %v335 = vld [vmem:[#allocation7 + $0x90] sm:$0xff]
    %v336 = vld [vmem:[#allocation7 + $0x98] sm:$0xf]
    %v337 = vld [vmem:[#allocation7 + $0x9c] sm:$0xff]
    %v338 = vld [vmem:[#allocation7 + $0xa4] sm:$0xf]
    %v339 = vld [vmem:[#allocation7 + $0xa8] sm:$0xff]
    %v340 = vld [vmem:[#allocation7 + $0xb0] sm:$0xf]
    %v341 = vld [vmem:[#allocation7 + $0xb4] sm:$0xff]
    %v342 = vld [vmem:[#allocation7 + $0xbc] sm:$0xf]
    %v343 = vld [vmem:[#allocation7 + $0xc0] sm:$0xff]
    %v344 = vld [vmem:[#allocation7 + $0xc8] sm:$0xf]
    %v345 = vld [vmem:[#allocation7 + $0xcc] sm:$0xff]
    %v346 = vld [vmem:[#allocation7 + $0xd4] sm:$0xf]
    %v347 = vld [vmem:[#allocation7 + $0xd8] sm:$0xff]
    %v348 = vld [vmem:[#allocation7 + $0xe0] sm:$0xf]
    %v349 = vld [vmem:[#allocation7 + $0xe4] sm:$0xff]
    %v350 = vld [vmem:[#allocation7 + $0xec] sm:$0xf]
    %v351 = vld [vmem:[#allocation7 + $0xf0] sm:$0xff]
    %v352 = vld [vmem:[#allocation7 + $0xf8] sm:$0xf]
    %v353 = vld [vmem:[#allocation7 + $0xfc] sm:$0xff]
    %v354 = vld [vmem:[#allocation7 + $0x104] sm:$0xf]
    %v355 = vld [vmem:[#allocation7 + $0x108] sm:$0xff]
    %v356 = vld [vmem:[#allocation7 + $0x110] sm:$0xf]
    %v357 = vld [vmem:[#allocation7 + $0x114] sm:$0xff]
    %v358 = vld [vmem:[#allocation7 + $0x11c] sm:$0xf]
    %v359 = vld [vmem:[#allocation7 + $0x120] sm:$0xff]
    %v360 = vld [vmem:[#allocation7 + $0x128] sm:$0xf]
    %v361 = vld [vmem:[#allocation7 + $0x12c] sm:$0xff]
    %v362 = vld [vmem:[#allocation7 + $0x134] sm:$0xf]
    %v363 = vld [vmem:[#allocation7 + $0x138] sm:$0xff]
    %v364 = vld [vmem:[#allocation7 + $0x140] sm:$0xf]
    %v365 = vld [vmem:[#allocation7 + $0x144] sm:$0xff]
    %v366 = vld [vmem:[#allocation7 + $0x14c] sm:$0xf]
    %v367 = vld [vmem:[#allocation7 + $0x150] sm:$0xff]
    %v368 = vld [vmem:[#allocation7 + $0x158] sm:$0xf]
    %v369 = vld [vmem:[#allocation7 + $0x15c] sm:$0xff]
    %v370 = vld [vmem:[#allocation7 + $0x164] sm:$0xf]
    %v371 = vld [vmem:[#allocation7 + $0x168] sm:$0xff]
    %v372 = vld [vmem:[#allocation7 + $0x170] sm:$0xf]
    %v373 = vld [vmem:[#allocation7 + $0x174] sm:$0xff]
    %v374 = vld [vmem:[#allocation7 + $0x17c] sm:$0xf]
    %v375 = vld [vmem:[#allocation7 + $0x180] sm:$0xff]
    %v376 = vld [vmem:[#allocation7 + $0x188] sm:$0xf]
    %v377 = vld [vmem:[#allocation7 + $0x18c] sm:$0xff]
    %v378 = vld [vmem:[#allocation7 + $0x194] sm:$0xf]
    %v379 = vld [vmem:[#allocation7 + $0x198] sm:$0xff]
    %v380 = vld [vmem:[#allocation7 + $0x1a0] sm:$0xf]
    %v381 = vld [vmem:[#allocation7 + $0x1a4] sm:$0xff]
    %v382 = vld [vmem:[#allocation7 + $0x1ac] sm:$0xf]
    %v383 = vld [vmem:[#allocation7 + $0x1b0] sm:$0xff]
    %v384 = vld [vmem:[#allocation7 + $0x1b8] sm:$0xf]
    %v385 = vld [vmem:[#allocation7 + $0x1bc] sm:$0xff]
    %v386 = vld [vmem:[#allocation7 + $0x1c4] sm:$0xf]
    %v387 = vld [vmem:[#allocation7 + $0x1c8] sm:$0xff]
    %v388 = vld [vmem:[#allocation7 + $0x1d0] sm:$0xf]
    %v389 = vld [vmem:[#allocation7 + $0x1d4] sm:$0xff]
    %v390 = vld [vmem:[#allocation7 + $0x1dc] sm:$0xf]
    %v391 = vld [vmem:[#allocation7 + $0x1e0] sm:$0xff]
    %v392 = vld [vmem:[#allocation7 + $0x1e8] sm:$0xf]
    %v393 = vld [vmem:[#allocation7 + $0x1ec] sm:$0xff]
    %v394 = vld [vmem:[#allocation7 + $0x1f4] sm:$0xf]
    %v395 = vld [vmem:[#allocation7 + $0x1f8] sm:$0xff]
    %v396 = vld [vmem:[#allocation7 + $0x200] sm:$0xf]
    %v397 = vld [vmem:[#allocation7 + $0x204] sm:$0xff]
    %v398 = vld [vmem:[#allocation7 + $0x20c] sm:$0xf]
    %v399 = vld [vmem:[#allocation7 + $0x210] sm:$0xff]
    %v400 = vld [vmem:[#allocation7 + $0x218] sm:$0xf]
    %v401 = vld [vmem:[#allocation7 + $0x21c] sm:$0xff]
    %v402 = vld [vmem:[#allocation7 + $0x224] sm:$0xf]
    %v403 = vld [vmem:[#allocation7 + $0x228] sm:$0xff]
    %v404 = vld [vmem:[#allocation7 + $0x230] sm:$0xf]
    %v405 = vld [vmem:[#allocation7 + $0x234] sm:$0xff]
    %v406 = vld [vmem:[#allocation7 + $0x23c] sm:$0xf]
    %v407 = vld [vmem:[#allocation7 + $0x240] sm:$0xff]
    %v408 = vld [vmem:[#allocation7 + $0x248] sm:$0xf]
    %v409 = vld [vmem:[#allocation7 + $0x24c] sm:$0xff]
    %v410 = vld [vmem:[#allocation7 + $0x254] sm:$0xf]
    %v411 = vld [vmem:[#allocation7 + $0x258] sm:$0xff]
    %v412 = vld [vmem:[#allocation7 + $0x260] sm:$0xf]
    %v413 = vld [vmem:[#allocation7 + $0x264] sm:$0xff]
    %v414 = vld [vmem:[#allocation7 + $0x26c] sm:$0xf]
    %v415 = vld [vmem:[#allocation7 + $0x270] sm:$0xff]
    %v416 = vld [vmem:[#allocation7 + $0x278] sm:$0xf]
    %v417 = vld [vmem:[#allocation7 + $0x27c] sm:$0xff]
    %v418 = vld [vmem:[#allocation7 + $0x284] sm:$0xf]
    %v419 = vld [vmem:[#allocation7 + $0x288] sm:$0xff]
    %v420 = vld [vmem:[#allocation7 + $0x290] sm:$0xf]
    %v421 = vld [vmem:[#allocation7 + $0x294] sm:$0xff]
    %v422 = vld [vmem:[#allocation7 + $0x29c] sm:$0xf]
    %v423 = vld [vmem:[#allocation7 + $0x2a0] sm:$0xff]
    %v424 = vld [vmem:[#allocation7 + $0x2a8] sm:$0xf]
    %v425 = vld [vmem:[#allocation7 + $0x2ac] sm:$0xff]
    %v426 = vld [vmem:[#allocation7 + $0x2b4] sm:$0xf]
    %v427 = vld [vmem:[#allocation7 + $0x2b8] sm:$0xff]
    %v428 = vld [vmem:[#allocation7 + $0x2c0] sm:$0xf]
    %v429 = vld [vmem:[#allocation7 + $0x2c4] sm:$0xff]
    %v430 = vld [vmem:[#allocation7 + $0x2cc] sm:$0xf]
    %v431 = vld [vmem:[#allocation7 + $0x2d0] sm:$0xff]
    %v432 = vld [vmem:[#allocation7 + $0x2d8] sm:$0xf]
    %v433 = vld [vmem:[#allocation7 + $0x2dc] sm:$0xff]
    %v434 = vld [vmem:[#allocation7 + $0x2e4] sm:$0xf]
    %v435 = vld [vmem:[#allocation7 + $0x2e8] sm:$0xff]
    %v436 = vld [vmem:[#allocation7 + $0x2f0] sm:$0xf]
    %v437 = vld [vmem:[#allocation7 + $0x2f4] sm:$0xff]
    %v438 = vld [vmem:[#allocation7 + $0x2fc] sm:$0xf]
    %v440 = vlaneseq
    %v441 = vshrl.u32 %v440, 7
    %v442 = vsub.s32 0, %v441
    %v443 = vrot.slane %v79, %v442
    %v444 = vlaneseq
    %v445 = vshrl.u32 %v444, 7
    %v446 = vsub.s32 1, %v445
    %v447 = vrot.slane %v79, %v446
    %v448 = vlaneseq
    %v449 = vshrl.u32 %v448, 7
    %v450 = vsub.s32 2, %v449
    %v451 = vrot.slane %v79, %v450
    %v583 = vunpack.c.l.b16 %v311
    %v584 = vunpack.c.h.b16 %v311
    %v585 = vunpack.c.l.b16 %v312
    %v586 = vunpack.c.l.b16 %v313
    %v587 = vunpack.c.h.b16 %v313
    %v588 = vunpack.c.l.b16 %v314
    %v589 = vunpack.c.l.b16 %v315
    %v590 = vunpack.c.h.b16 %v315
    %v591 = vunpack.c.l.b16 %v316
    %v592 = vunpack.c.l.b16 %v317
    %v593 = vunpack.c.h.b16 %v317
    %v594 = vunpack.c.l.b16 %v318
    %v595 = vunpack.c.l.b16 %v319
    %v596 = vunpack.c.h.b16 %v319
    %v597 = vunpack.c.l.b16 %v320
    %v598 = vunpack.c.l.b16 %v321
    %v599 = vunpack.c.h.b16 %v321
    %v600 = vunpack.c.l.b16 %v322
    %v601 = vunpack.c.l.b16 %v323
    %v602 = vunpack.c.h.b16 %v323
    %v603 = vunpack.c.l.b16 %v324
    %v604 = vunpack.c.l.b16 %v325
    %v605 = vunpack.c.h.b16 %v325
    %v606 = vunpack.c.l.b16 %v326
    %v607 = vunpack.c.l.b16 %v327
    %v608 = vunpack.c.h.b16 %v327
    %v609 = vunpack.c.l.b16 %v328
    %v610 = vunpack.c.l.b16 %v329
    %v611 = vunpack.c.h.b16 %v329
    %v612 = vunpack.c.l.b16 %v330
    %v613 = vunpack.c.l.b16 %v331
    %v614 = vunpack.c.h.b16 %v331
    %v615 = vunpack.c.l.b16 %v332
    %v616 = vunpack.c.l.b16 %v333
    %v617 = vunpack.c.h.b16 %v333
    %v618 = vunpack.c.l.b16 %v334
    %v619 = vunpack.c.l.b16 %v335
    %v620 = vunpack.c.h.b16 %v335
    %v621 = vunpack.c.l.b16 %v336
    %v622 = vunpack.c.l.b16 %v337
    %v623 = vunpack.c.h.b16 %v337
    %v624 = vunpack.c.l.b16 %v338
    %v625 = vunpack.c.l.b16 %v339
    %v626 = vunpack.c.h.b16 %v339
    %v627 = vunpack.c.l.b16 %v340
    %v628 = vunpack.c.l.b16 %v341
    %v629 = vunpack.c.h.b16 %v341
    %v630 = vunpack.c.l.b16 %v342
    %v631 = vunpack.c.l.b16 %v343
    %v632 = vunpack.c.h.b16 %v343
    %v633 = vunpack.c.l.b16 %v344
    %v634 = vunpack.c.l.b16 %v345
    %v635 = vunpack.c.h.b16 %v345
    %v636 = vunpack.c.l.b16 %v346
    %v637 = vunpack.c.l.b16 %v347
    %v638 = vunpack.c.h.b16 %v347
    %v639 = vunpack.c.l.b16 %v348
    %v640 = vunpack.c.l.b16 %v349
    %v641 = vunpack.c.h.b16 %v349
    %v642 = vunpack.c.l.b16 %v350
    %v643 = vunpack.c.l.b16 %v351
    %v644 = vunpack.c.h.b16 %v351
    %v645 = vunpack.c.l.b16 %v352
    %v646 = vunpack.c.l.b16 %v353
    %v647 = vunpack.c.h.b16 %v353
    %v648 = vunpack.c.l.b16 %v354
    %v649 = vunpack.c.l.b16 %v355
    %v650 = vunpack.c.h.b16 %v355
    %v651 = vunpack.c.l.b16 %v356
    %v652 = vunpack.c.l.b16 %v357
    %v653 = vunpack.c.h.b16 %v357
    %v654 = vunpack.c.l.b16 %v358
    %v655 = vunpack.c.l.b16 %v359
    %v656 = vunpack.c.h.b16 %v359
    %v657 = vunpack.c.l.b16 %v360
    %v658 = vunpack.c.l.b16 %v361
    %v659 = vunpack.c.h.b16 %v361
    %v660 = vunpack.c.l.b16 %v362
    %v661 = vunpack.c.l.b16 %v363
    %v662 = vunpack.c.h.b16 %v363
    %v663 = vunpack.c.l.b16 %v364
    %v664 = vunpack.c.l.b16 %v365
    %v665 = vunpack.c.h.b16 %v365
    %v666 = vunpack.c.l.b16 %v366
    %v667 = vunpack.c.l.b16 %v367
    %v668 = vunpack.c.h.b16 %v367
    %v669 = vunpack.c.l.b16 %v368
    %v670 = vunpack.c.l.b16 %v369
    %v671 = vunpack.c.h.b16 %v369
    %v672 = vunpack.c.l.b16 %v370
    %v673 = vunpack.c.l.b16 %v371
    %v674 = vunpack.c.h.b16 %v371
    %v675 = vunpack.c.l.b16 %v372
    %v676 = vunpack.c.l.b16 %v373
    %v677 = vunpack.c.h.b16 %v373
    %v678 = vunpack.c.l.b16 %v374
    %v679 = vunpack.c.l.b16 %v375
    %v680 = vunpack.c.h.b16 %v375
    %v681 = vunpack.c.l.b16 %v376
    %v682 = vunpack.c.l.b16 %v377
    %v683 = vunpack.c.h.b16 %v377
    %v684 = vunpack.c.l.b16 %v378
    %v685 = vunpack.c.l.b16 %v379
    %v686 = vunpack.c.h.b16 %v379
    %v687 = vunpack.c.l.b16 %v380
    %v688 = vunpack.c.l.b16 %v381
    %v689 = vunpack.c.h.b16 %v381
    %v690 = vunpack.c.l.b16 %v382
    %v691 = vunpack.c.l.b16 %v383
    %v692 = vunpack.c.h.b16 %v383
    %v693 = vunpack.c.l.b16 %v384
    %v694 = vunpack.c.l.b16 %v385
    %v695 = vunpack.c.h.b16 %v385
    %v696 = vunpack.c.l.b16 %v386
    %v697 = vunpack.c.l.b16 %v387
    %v698 = vunpack.c.h.b16 %v387
    %v699 = vunpack.c.l.b16 %v388
    %v700 = vunpack.c.l.b16 %v389
    %v701 = vunpack.c.h.b16 %v389
    %v702 = vunpack.c.l.b16 %v390
    %v703 = vunpack.c.l.b16 %v391
    %v704 = vunpack.c.h.b16 %v391
    %v705 = vunpack.c.l.b16 %v392
    %v706 = vunpack.c.l.b16 %v393
    %v707 = vunpack.c.h.b16 %v393
    %v708 = vunpack.c.l.b16 %v394
    %v709 = vunpack.c.l.b16 %v395
    %v710 = vunpack.c.h.b16 %v395
    %v711 = vunpack.c.l.b16 %v396
    %v712 = vunpack.c.l.b16 %v397
    %v713 = vunpack.c.h.b16 %v397
    %v714 = vunpack.c.l.b16 %v398
    %v715 = vunpack.c.l.b16 %v399
    %v716 = vunpack.c.h.b16 %v399
    %v717 = vunpack.c.l.b16 %v400
    %v718 = vunpack.c.l.b16 %v401
    %v719 = vunpack.c.h.b16 %v401
    %v720 = vunpack.c.l.b16 %v402
    %v721 = vunpack.c.l.b16 %v403
    %v722 = vunpack.c.h.b16 %v403
    %v723 = vunpack.c.l.b16 %v404
    %v724 = vunpack.c.l.b16 %v405
    %v725 = vunpack.c.h.b16 %v405
    %v726 = vunpack.c.l.b16 %v406
    %v727 = vunpack.c.l.b16 %v407
    %v728 = vunpack.c.h.b16 %v407
    %v729 = vunpack.c.l.b16 %v408
    %v730 = vunpack.c.l.b16 %v409
    %v731 = vunpack.c.h.b16 %v409
    %v732 = vunpack.c.l.b16 %v410
    %v733 = vunpack.c.l.b16 %v411
    %v734 = vunpack.c.h.b16 %v411
    %v735 = vunpack.c.l.b16 %v412
    %v736 = vunpack.c.l.b16 %v413
    %v737 = vunpack.c.h.b16 %v413
    %v738 = vunpack.c.l.b16 %v414
    %v739 = vunpack.c.l.b16 %v415
    %v740 = vunpack.c.h.b16 %v415
    %v741 = vunpack.c.l.b16 %v416
    %v742 = vunpack.c.l.b16 %v417
    %v743 = vunpack.c.h.b16 %v417
    %v744 = vunpack.c.l.b16 %v418
    %v745 = vunpack.c.l.b16 %v419
    %v746 = vunpack.c.h.b16 %v419
    %v747 = vunpack.c.l.b16 %v420
    %v748 = vunpack.c.l.b16 %v421
    %v749 = vunpack.c.h.b16 %v421
    %v750 = vunpack.c.l.b16 %v422
    %v751 = vunpack.c.l.b16 %v423
    %v752 = vunpack.c.h.b16 %v423
    %v753 = vunpack.c.l.b16 %v424
    %v754 = vunpack.c.l.b16 %v425
    %v755 = vunpack.c.h.b16 %v425
    %v756 = vunpack.c.l.b16 %v426
    %v757 = vunpack.c.l.b16 %v427
    %v758 = vunpack.c.h.b16 %v427
    %v759 = vunpack.c.l.b16 %v428
    %v760 = vunpack.c.l.b16 %v429
    %v761 = vunpack.c.h.b16 %v429
    %v762 = vunpack.c.l.b16 %v430
    %v763 = vunpack.c.l.b16 %v431
    %v764 = vunpack.c.h.b16 %v431
    %v765 = vunpack.c.l.b16 %v432
    %v766 = vunpack.c.l.b16 %v433
    %v767 = vunpack.c.h.b16 %v433
    %v768 = vunpack.c.l.b16 %v434
    %v769 = vunpack.c.l.b16 %v435
    %v770 = vunpack.c.h.b16 %v435
    %v771 = vunpack.c.l.b16 %v436
    %v772 = vunpack.c.l.b16 %v437
    %v773 = vunpack.c.h.b16 %v437
    %v774 = vunpack.c.l.b16 %v438
    %v775 = vpack.c.b16 %v586, %v583
    %v776 = vpack.c.b16 %v587, %v584
    %v777 = vpack.c.b16 %v588, %v585
    %v778 = vpack.c.b16 %v592, %v589
    %v779 = vpack.c.b16 %v593, %v590
    %v780 = vpack.c.b16 %v594, %v591
    %v781 = vpack.c.b16 %v598, %v595
    %v782 = vpack.c.b16 %v599, %v596
    %v783 = vpack.c.b16 %v600, %v597
    %v784 = vpack.c.b16 %v604, %v601
    %v785 = vpack.c.b16 %v605, %v602
    %v786 = vpack.c.b16 %v606, %v603
    %v787 = vpack.c.b16 %v610, %v607
    %v788 = vpack.c.b16 %v611, %v608
    %v789 = vpack.c.b16 %v612, %v609
    %v790 = vpack.c.b16 %v616, %v613
    %v791 = vpack.c.b16 %v617, %v614
    %v792 = vpack.c.b16 %v618, %v615
    %v793 = vpack.c.b16 %v622, %v619
    %v794 = vpack.c.b16 %v623, %v620
    %v795 = vpack.c.b16 %v624, %v621
    %v796 = vpack.c.b16 %v628, %v625
    %v797 = vpack.c.b16 %v629, %v626
    %v798 = vpack.c.b16 %v630, %v627
    %v799 = vpack.c.b16 %v634, %v631
    %v800 = vpack.c.b16 %v635, %v632
    %v801 = vpack.c.b16 %v636, %v633
    %v802 = vpack.c.b16 %v640, %v637
    %v803 = vpack.c.b16 %v641, %v638
    %v804 = vpack.c.b16 %v642, %v639
    %v805 = vpack.c.b16 %v646, %v643
    %v806 = vpack.c.b16 %v647, %v644
    %v807 = vpack.c.b16 %v648, %v645
    %v808 = vpack.c.b16 %v652, %v649
    %v809 = vpack.c.b16 %v653, %v650
    %v810 = vpack.c.b16 %v654, %v651
    %v811 = vpack.c.b16 %v658, %v655
    %v812 = vpack.c.b16 %v659, %v656
    %v813 = vpack.c.b16 %v660, %v657
    %v814 = vpack.c.b16 %v664, %v661
    %v815 = vpack.c.b16 %v665, %v662
    %v816 = vpack.c.b16 %v666, %v663
    %v817 = vpack.c.b16 %v670, %v667
    %v818 = vpack.c.b16 %v671, %v668
    %v819 = vpack.c.b16 %v672, %v669
    %v820 = vpack.c.b16 %v676, %v673
    %v821 = vpack.c.b16 %v677, %v674
    %v822 = vpack.c.b16 %v678, %v675
    %v823 = vpack.c.b16 %v682, %v679
    %v824 = vpack.c.b16 %v683, %v680
    %v825 = vpack.c.b16 %v684, %v681
    %v826 = vpack.c.b16 %v688, %v685
    %v827 = vpack.c.b16 %v689, %v686
    %v828 = vpack.c.b16 %v690, %v687
    %v829 = vpack.c.b16 %v694, %v691
    %v830 = vpack.c.b16 %v695, %v692
    %v831 = vpack.c.b16 %v696, %v693
    %v832 = vpack.c.b16 %v700, %v697
    %v833 = vpack.c.b16 %v701, %v698
    %v834 = vpack.c.b16 %v702, %v699
    %v835 = vpack.c.b16 %v706, %v703
    %v836 = vpack.c.b16 %v707, %v704
    %v837 = vpack.c.b16 %v708, %v705
    %v838 = vpack.c.b16 %v712, %v709
    %v839 = vpack.c.b16 %v713, %v710
    %v840 = vpack.c.b16 %v714, %v711
    %v841 = vpack.c.b16 %v718, %v715
    %v842 = vpack.c.b16 %v719, %v716
    %v843 = vpack.c.b16 %v720, %v717
    %v844 = vpack.c.b16 %v724, %v721
    %v845 = vpack.c.b16 %v725, %v722
    %v846 = vpack.c.b16 %v726, %v723
    %v847 = vpack.c.b16 %v730, %v727
    %v848 = vpack.c.b16 %v731, %v728
    %v849 = vpack.c.b16 %v732, %v729
    %v850 = vpack.c.b16 %v736, %v733
    %v851 = vpack.c.b16 %v737, %v734
    %v852 = vpack.c.b16 %v738, %v735
    %v853 = vpack.c.b16 %v742, %v739
    %v854 = vpack.c.b16 %v743, %v740
    %v855 = vpack.c.b16 %v744, %v741
    %v856 = vpack.c.b16 %v748, %v745
    %v857 = vpack.c.b16 %v749, %v746
    %v858 = vpack.c.b16 %v750, %v747
    %v859 = vpack.c.b16 %v754, %v751
    %v860 = vpack.c.b16 %v755, %v752
    %v861 = vpack.c.b16 %v756, %v753
    %v862 = vpack.c.b16 %v760, %v757
    %v863 = vpack.c.b16 %v761, %v758
    %v864 = vpack.c.b16 %v762, %v759
    %v865 = vpack.c.b16 %v766, %v763
    %v866 = vpack.c.b16 %v767, %v764
    %v867 = vpack.c.b16 %v768, %v765
    %v868 = vpack.c.b16 %v772, %v769
    %v869 = vpack.c.b16 %v773, %v770
    %v870 = vpack.c.b16 %v774, %v771
    %967 = vmatprep.subr.bf16.mxu0 %v776
    %968 = vmatpush1.bf16.msra.mxu0 %v775
    %969 = vmatprep.subr.bf16.mxu0 %v779
    %970 = vmatpush1.bf16.msra.mxu0 %v778
    %971 = vmatprep.subr.bf16.mxu0 %v782
    %972 = vmatpush1.bf16.msra.mxu0 %v781
    %973 = vmatprep.subr.bf16.mxu0 %v785
    %974 = vmatpush1.bf16.msra.mxu0 %v784
    %975 = vmatprep.subr.bf16.mxu0 %v788
    %976 = vmatpush1.bf16.msra.mxu0 %v787
    %977 = vmatprep.subr.bf16.mxu0 %v791
    %978 = vmatpush1.bf16.msra.mxu0 %v790
    %979 = vmatprep.subr.bf16.mxu0 %v794
    %980 = vmatpush1.bf16.msra.mxu0 %v793
    %981 = vmatprep.subr.bf16.mxu0 %v797
    %982 = vmatpush1.bf16.msra.mxu0 %v796
    %983 = vmatprep.subr.bf16.mxu0 %v800
    %984 = vmatpush1.bf16.msra.mxu0 %v799
    %985 = vmatprep.subr.bf16.mxu0 %v803
    %986 = vmatpush1.bf16.msra.mxu0 %v802
    %987 = vmatprep.subr.bf16.mxu0 %v806
    %988 = vmatpush1.bf16.msra.mxu0 %v805
    %989 = vmatprep.subr.bf16.mxu0 %v809
    %990 = vmatpush1.bf16.msra.mxu0 %v808
    %991 = vmatprep.subr.bf16.mxu0 %v812
    %992 = vmatpush1.bf16.msra.mxu0 %v811
    %993 = vmatprep.subr.bf16.mxu0 %v815
    %994 = vmatpush1.bf16.msra.mxu0 %v814
    %995 = vmatprep.subr.bf16.mxu0 %v818
    %996 = vmatpush1.bf16.msra.mxu0 %v817
    %997 = vmatprep.subr.bf16.mxu0 %v821
    %998 = vmatpush1.bf16.msra.mxu0 %v820
    %999 = vmatprep.mubr.bf16.mxu0 %v308
    %1000 = vmatmul.mubr.bf16.gmra.mrb[0].mxu0 %v307
    %v1001 = vpop.f32.mrb[0].mxu0
    %v1002 = vadd.f32 %v443, %v1001
    %v1003 = vpop.f32.mrb[0].mxu0
    %v1004 = vadd.f32 %v447, %v1003
    %v1005 = vpop.f32.mrb[0].mxu0
    %v1006 = vpop.f32.mrb[0].mxu0
    %1007 = vdwg.mxu0
    %1008 = vmatprep.subr.bf16.mxu0 %v824
    %1009 = vmatpush1.bf16.msra.mxu0 %v823
    %1010 = vmatprep.subr.bf16.mxu0 %v827
    %1011 = vmatpush1.bf16.msra.mxu0 %v826
    %1012 = vmatprep.subr.bf16.mxu0 %v830
    %1013 = vmatpush1.bf16.msra.mxu0 %v829
    %1014 = vmatprep.subr.bf16.mxu0 %v833
    %1015 = vmatpush1.bf16.msra.mxu0 %v832
    %1016 = vmatprep.subr.bf16.mxu0 %v836
    %1017 = vmatpush1.bf16.msra.mxu0 %v835
    %1018 = vmatprep.subr.bf16.mxu0 %v839
    %1019 = vmatpush1.bf16.msra.mxu0 %v838
    %1020 = vmatprep.subr.bf16.mxu0 %v842
    %1021 = vmatpush1.bf16.msra.mxu0 %v841
    %1022 = vmatprep.subr.bf16.mxu0 %v845
    %1023 = vmatpush1.bf16.msra.mxu0 %v844
    %1024 = vmatprep.subr.bf16.mxu0 %v848
    %1025 = vmatpush1.bf16.msra.mxu0 %v847
    %1026 = vmatprep.subr.bf16.mxu0 %v851
    %1027 = vmatpush1.bf16.msra.mxu0 %v850
    %1028 = vmatprep.subr.bf16.mxu0 %v854
    %1029 = vmatpush1.bf16.msra.mxu0 %v853
    %1030 = vmatprep.subr.bf16.mxu0 %v857
    %1031 = vmatpush1.bf16.msra.mxu0 %v856
    %1032 = vmatprep.subr.bf16.mxu0 %v860
    %1033 = vmatpush1.bf16.msra.mxu0 %v859
    %1034 = vmatprep.subr.bf16.mxu0 %v863
    %1035 = vmatpush1.bf16.msra.mxu0 %v862
    %1036 = vmatprep.subr.bf16.mxu0 %v866
    %1037 = vmatpush1.bf16.msra.mxu0 %v865
    %1038 = vmatprep.subr.bf16.mxu0 %v869
    %1039 = vmatpush1.bf16.msra.mxu0 %v868
    %1040 = vmatprep.mubr.bf16.mxu0 %v310
    %1041 = vmatmul.mubr.bf16.gmra.mrb[0].mxu0 %v309
    %v1042 = vpop.f32.mrb[0].mxu0
    %v1043 = vadd.f32 %v1002, %v1042
    %v1044 = vpop.f32.mrb[0].mxu0
    %v1045 = vadd.f32 %v1004, %v1044
    %v1046 = vpop.f32.mrb[0].mxu0
    %v1047 = vpop.f32.mrb[0].mxu0
    %1048 = vdwg.mxu0
    %1049 = vmatprep.subr.bf16.mxu0 0
    %1050 = vmatpush1.bf16.msra.mxu0 %v777
    %1051 = vmatprep.subr.bf16.mxu0 0
    %1052 = vmatpush1.bf16.msra.mxu0 %v780
    %1053 = vmatprep.subr.bf16.mxu0 0
    %1054 = vmatpush1.bf16.msra.mxu0 %v783
    %1055 = vmatprep.subr.bf16.mxu0 0
    %1056 = vmatpush1.bf16.msra.mxu0 %v786
    %1057 = vmatprep.subr.bf16.mxu0 0
    %1058 = vmatpush1.bf16.msra.mxu0 %v789
    %1059 = vmatprep.subr.bf16.mxu0 0
    %1060 = vmatpush1.bf16.msra.mxu0 %v792
    %1061 = vmatprep.subr.bf16.mxu0 0
    %1062 = vmatpush1.bf16.msra.mxu0 %v795
    %1063 = vmatprep.subr.bf16.mxu0 0
    %1064 = vmatpush1.bf16.msra.mxu0 %v798
    %1065 = vmatprep.subr.bf16.mxu0 0
    %1066 = vmatpush1.bf16.msra.mxu0 %v801
    %1067 = vmatprep.subr.bf16.mxu0 0
    %1068 = vmatpush1.bf16.msra.mxu0 %v804
    %1069 = vmatprep.subr.bf16.mxu0 0
    %1070 = vmatpush1.bf16.msra.mxu0 %v807
    %1071 = vmatprep.subr.bf16.mxu0 0
    %1072 = vmatpush1.bf16.msra.mxu0 %v810
    %1073 = vmatprep.subr.bf16.mxu0 0
    %1074 = vmatpush1.bf16.msra.mxu0 %v813
    %1075 = vmatprep.subr.bf16.mxu0 0
    %1076 = vmatpush1.bf16.msra.mxu0 %v816
    %1077 = vmatprep.subr.bf16.mxu0 0
    %1078 = vmatpush1.bf16.msra.mxu0 %v819
    %1079 = vmatprep.subr.bf16.mxu0 0
    %1080 = vmatpush1.bf16.msra.mxu0 %v822
    %1081 = vmatprep.mubr.bf16.mxu0 %v308
    %1082 = vmatmul.mubr.bf16.gmra.mrb[0].mxu0 %v307
    %v1083 = vpop.f32.mrb[0].mxu0
    %v1084 = vadd.f32 %v451, %v1083
    %v1085 = vpop.f32.mrb[0].mxu0
    %v1086 = vpop.f32.mrb[0].mxu0
    %v1087 = vpop.f32.mrb[0].mxu0
    %1088 = vdwg.mxu0
    %1089 = vmatprep.subr.bf16.mxu0 0
    %1090 = vmatpush1.bf16.msra.mxu0 %v825
    %1091 = vmatprep.subr.bf16.mxu0 0
    %1092 = vmatpush1.bf16.msra.mxu0 %v828
    %1093 = vmatprep.subr.bf16.mxu0 0
    %1094 = vmatpush1.bf16.msra.mxu0 %v831
    %1095 = vmatprep.subr.bf16.mxu0 0
    %1096 = vmatpush1.bf16.msra.mxu0 %v834
    %1097 = vmatprep.subr.bf16.mxu0 0
    %1098 = vmatpush1.bf16.msra.mxu0 %v837
    %1099 = vmatprep.subr.bf16.mxu0 0
    %1100 = vmatpush1.bf16.msra.mxu0 %v840
    %1101 = vmatprep.subr.bf16.mxu0 0
    %1102 = vmatpush1.bf16.msra.mxu0 %v843
    %1103 = vmatprep.subr.bf16.mxu0 0
    %1104 = vmatpush1.bf16.msra.mxu0 %v846
    %1105 = vmatprep.subr.bf16.mxu0 0
    %1106 = vmatpush1.bf16.msra.mxu0 %v849
    %1107 = vmatprep.subr.bf16.mxu0 0
    %1108 = vmatpush1.bf16.msra.mxu0 %v852
    %1109 = vmatprep.subr.bf16.mxu0 0
    %1110 = vmatpush1.bf16.msra.mxu0 %v855
    %1111 = vmatprep.subr.bf16.mxu0 0
    %1112 = vmatpush1.bf16.msra.mxu0 %v858
    %1113 = vmatprep.subr.bf16.mxu0 0
    %1114 = vmatpush1.bf16.msra.mxu0 %v861
    %1115 = vmatprep.subr.bf16.mxu0 0
    %1116 = vmatpush1.bf16.msra.mxu0 %v864
    %1117 = vmatprep.subr.bf16.mxu0 0
    %1118 = vmatpush1.bf16.msra.mxu0 %v867
    %1119 = vmatprep.subr.bf16.mxu0 0
    %1120 = vmatpush1.bf16.msra.mxu0 %v870
    %1121 = vmatprep.mubr.bf16.mxu0 %v310
    %1122 = vmatmul.mubr.bf16.gmra.mrb[0].mxu0 %v309
    %v1123 = vpop.f32.mrb[0].mxu0
    %v1124 = vadd.f32 %v1084, %v1123
    %v1125 = vpop.f32.mrb[0].mxu0
    %v1126 = vpop.f32.mrb[0].mxu0
    %v1127 = vpop.f32.mrb[0].mxu0
    %1128 = vdwg.mxu0
    %v1129 = vadd.f32 %v1043, %v1045
    %v1130 = vadd.f32 %v1129, %v1124
    %1131 = vadd.xlane.f32.xlu0 %v1130
    %v1132 = vpop.xlane.xlu0 %1131
    %v1133 = vmul.f32 %v1043, %v1043
    %v1134 = vmul.f32 %v1045, %v1045
    %v1135 = vmul.f32 %v1124, %v1124
    %v1136 = vadd.f32 %v1133, %v1134
    %v1137 = vadd.f32 %v1136, %v1135
    %1138 = vadd.xlane.f32.xlu0 %v1137
    %v1139 = vpop.xlane.xlu0 %1138
    %v1140 = vmul.f32 %v1132, 0.0033333334
    %v1141 = vmul.f32 %v1139, 0.0033333334
    %v1142 = vmul.f32 %v1140, %v1140
    %v1143 = vsub.f32 %v1141, %v1142
    %v1144 = vadd.f32 %v1143, 1e-05
    %v1145 = vrsqrt.pop %v1144
    %v1146 = vsub.f32 %v1043, %v1140
    %v1147 = vsub.f32 %v1045, %v1140
    %v1148 = vsub.f32 %v1124, %v1140
    %v1149 = vmul.f32 %v1146, %v1145
    %v1150 = vmul.f32 %v1147, %v1145
    %v1151 = vmul.f32 %v1148, %v1145
    %v1153 = vlaneseq
    %v1154 = vshrl.u32 %v1153, 7
    %v1155 = vsub.s32 0, %v1154
    %v1156 = vrot.slane %v81, %v1155
    %v1157 = vlaneseq
    %v1158 = vshrl.u32 %v1157, 7
    %v1159 = vsub.s32 1, %v1158
    %v1160 = vrot.slane %v81, %v1159
    %v1161 = vlaneseq
    %v1162 = vshrl.u32 %v1161, 7
    %v1163 = vsub.s32 2, %v1162
    %v1164 = vrot.slane %v81, %v1163
    %v1168 = vmul.f32 %v1149, %v1156
    %v1169 = vmul.f32 %v1150, %v1160
    %v1170 = vmul.f32 %v1151, %v1164
    %v1172 = vlaneseq
    %v1173 = vshrl.u32 %v1172, 7
    %v1174 = vsub.s32 0, %v1173
    %v1175 = vrot.slane %v83, %v1174
    %v1176 = vlaneseq
    %v1177 = vshrl.u32 %v1176, 7
    %v1178 = vsub.s32 1, %v1177
    %v1179 = vrot.slane %v83, %v1178
    %v1180 = vlaneseq
    %v1181 = vshrl.u32 %v1180, 7
    %v1182 = vsub.s32 2, %v1181
    %v1183 = vrot.slane %v83, %v1182
    %v1187 = vadd.f32 %v1168, %v1175
    %v1188 = vadd.f32 %v1169, %v1179
    %v1189 = vadd.f32 %v1170, %v1183
    %v1190 = vld [vmem:[%s1] sm:$0xff]
    %1192 = vset.pattern.permute.xlu0 0
    %1193 = vperm.xlu0 %1192, %v1190
    %v1194 = vpop.permute.xlu0 %1193
    %v1196 = vlaneseq
    %v1197 = vshrl.u32 %v1196, 7
    %v1198 = vsub.s32 5, %v1197
    %v1199 = vrot.slane %v88, %v1198
    %v1200 = vlaneseq
    %v1201 = vshrl.u32 %v1200, 7
    %v1202 = vsub.s32 5, %v1201
    %v1203 = vrot.slane %v89, %v1202
    %v1204 = vlaneseq
    %v1205 = vshrl.u32 %v1204, 7
    %v1206 = vsub.s32 5, %v1205
    %v1207 = vrot.slane %v90, %v1206
    %v1208 = vmul.f32 %v1194, %v1199
    %v1209 = vmul.f32 %v1194, %v1203
    %v1210 = vmul.f32 %v1194, %v1207
    %v1212 = vlaneseq
    %v1213 = vshrl.u32 %v1212, 7
    %v1214 = vsub.s32 0, %v1213
    %v1215 = vrot.slane %v85, %v1214
    %v1216 = vlaneseq
    %v1217 = vshrl.u32 %v1216, 7
    %v1218 = vsub.s32 1, %v1217
    %v1219 = vrot.slane %v85, %v1218
    %v1220 = vlaneseq
    %v1221 = vshrl.u32 %v1220, 7
    %v1222 = vsub.s32 2, %v1221
    %v1223 = vrot.slane %v85, %v1222
    %v1227 = vadd.f32 %v1215, %v1208
    %v1228 = vadd.f32 %v1219, %v1209
    %v1229 = vadd.f32 %v1223, %v1210
    %1230 = vset.pattern.permute.xlu0 1
    %1231 = vperm.xlu0 %1230, %v1190
    %v1232 = vpop.permute.xlu0 %1231
    %v1234 = vlaneseq
    %v1235 = vshrl.u32 %v1234, 7
    %v1236 = vsub.s32 6, %v1235
    %v1237 = vrot.slane %v88, %v1236
    %v1238 = vlaneseq
    %v1239 = vshrl.u32 %v1238, 7
    %v1240 = vsub.s32 6, %v1239
    %v1241 = vrot.slane %v89, %v1240
    %v1242 = vlaneseq
    %v1243 = vshrl.u32 %v1242, 7
    %v1244 = vsub.s32 6, %v1243
    %v1245 = vrot.slane %v90, %v1244
    %v1246 = vmul.f32 %v1232, %v1237
    %v1247 = vmul.f32 %v1232, %v1241
    %v1248 = vmul.f32 %v1232, %v1245
    %v1249 = vadd.f32 %v1227, %v1246
    %v1250 = vadd.f32 %v1228, %v1247
    %v1251 = vadd.f32 %v1229, %v1248
    %v1252 = vmax.f32 %v1249, 0.0
    %v1253 = vmax.f32 %v1250, 0.0
    %v1254 = vmax.f32 %v1251, 0.0
    %v1255 = vadd.f32 %v1187, %v1252
    %v1256 = vadd.f32 %v1188, %v1253
    %v1257 = vadd.f32 %v1189, %v1254
    %v1258 = vmax.f32 %v1255, 0.0
    %v1259 = vmax.f32 %v1256, 0.0
    %v1260 = vmax.f32 %v1257, 0.0
    %v1262 = vlaneseq
    %v1263 = vshrl.u32 %v1262, 7
    %v1264 = vsub.s32 0, %v1263
    %v1265 = vrot.slane %v87, %v1264
    %v1266 = vlaneseq
    %v1267 = vshrl.u32 %v1266, 7
    %v1268 = vsub.s32 1, %v1267
    %v1269 = vrot.slane %v87, %v1268
    %v1270 = vlaneseq
    %v1271 = vshrl.u32 %v1270, 7
    %v1272 = vsub.s32 2, %v1271
    %v1273 = vrot.slane %v87, %v1272
    %v1277 = vmul.f32 %v1258, %v1265
    %v1278 = vmul.f32 %v1259, %v1269
    %v1279 = vmul.f32 %v1260, %v1273
    %v1280 = vadd.f32 %v1277, %v1278
    %v1281 = vadd.f32 %v1280, %v1279
    %1282 = vadd.xlane.f32.xlu0 %v1281
    %v1283 = vpop.xlane.xlu0 %1282
    %v1285 = vlaneseq
    %v1286 = vand.u32 %v1285, 127
    %v1287 = vlaneseq
    %v1288 = vshrl.u32 %v1287, 7
    %v1289 = vsub.s32 %v1286, %v1288
    %v1290 = vrot.slane %v1283, %v1289
    %vm1292 = vcmask 57344
    %1293 = vst.msk [vmem:[#allocation10] sm:$0x1] %vm1292, %v1290
    // Predicated region
    $region42: #{tpu_custom_call.1} parent=1 // pred_check
      _
    $region43: #{tpu_custom_call.1} parent=1 // pred_check_branch
      %1295 = sbr.rel (0) target = $region45
    $region44: #{tpu_custom_call.1} parent=1 // pred_region
      %s1297 = ssub.s32 16, 16
      %1298 = vsyncadd [#allocation4], %s1297
      %s1300 = sshll.u32 [#allocation10], 4
      %s1301 = int_to_ptr.vmem [resolvable:$true] %s1300
      %1303 = dma.vmem_to_hbm [thread:$0]  %s1301, 16, %s6, [#allocation4]
    $region45: #{tpu_custom_call.1} parent=1 // pred_fallthru
      _
    // Predicated region
    $region46: #{tpu_custom_call.1} parent=1 // pred_check
      _
    $region47: #{tpu_custom_call.1} parent=1 // pred_check_branch
      %1305 = sbr.rel (0) target = $region49
    $region48: #{tpu_custom_call.1} parent=1 // pred_region
      %1306 = dma.done [#allocation4], 16
    $region49: #{tpu_custom_call.1} parent=1 // pred_fallthru
      _
    %1307 = vsyncpa [#allocation3], 1
    %1308 = vsyncpa [#allocation6], 1
    %1309 = vsyncpa [#allocation9], 1
    %1310 = vsyncpa [#allocation4], 1

</llo_original>
